<compile_context>
chip_gen: v6e
topology: v6e:2x2x1
jax: 0.10.0
libtpu: 0.0.40
codegen_flags: <defaults>
</compile_context>

<pallas_src>
import functools

import numpy as np
import jax
import jax.numpy as jnp
from jax.experimental import pallas as pl
from jax.experimental.pallas import tpu as pltpu


_MXU_MIN_DIM = 32     # below this the unrolled VPU difference form wins (d=3 typical)
_LANE = 128
_ROW_TILE = 32        # int8 native tile is (32, 128); use 32-row granularity for all dtypes


def _round_up(x, mult):
    return ((x + mult - 1) // mult) * mult


def _vmem_capacity_bytes():
    try:
        return int(pltpu.get_tpu_info().vmem_capacity_bytes)  # 64 MiB v7x, 128 MiB v5e/v6e
    except Exception:
        return 64 * 1024 * 1024                               # conservative (v7x) fallback


def _radius_kernel(q_ref, xt_ref, out_ref, *, radius_sq, dim, emit_mask, use_mxu):
    """One query tile: masked squared distances (or int8 in-radius mask), [tm, n]."""
    q = q_ref[...].astype(jnp.float32)     # [tm, d]
    xt = xt_ref[...].astype(jnp.float32)   # [d, n]
    tm = q.shape[0]
    n = xt.shape[1]

    if use_mxu:
        # ||q - x||^2 = ||q||^2 + ||x||^2 - 2 q.x^T  (MXU form for large coord dims)
        qn = jnp.sum(q * q, axis=1, keepdims=True)            # [tm, 1]
        xn = jnp.sum(xt * xt, axis=0, keepdims=True)          # [1, n]
        sq = qn + xn - 2.0 * jnp.dot(q, xt, preferred_element_type=jnp.float32)
        sq = jnp.maximum(sq, jnp.float32(0.0))
    else:
        # exact difference form, unrolled over the small static coord dim (VPU)
        sq = jnp.zeros((tm, n), jnp.float32)
        for k in range(dim):
            diff = q[:, k:k + 1] - xt[k:k + 1, :]             # broadcast -> [tm, n]
            sq = sq + diff * diff

    # dist <= radius  <=>  dist^2 <= radius^2  (sqrt dropped from the critical path)
    mask = sq <= jnp.float32(radius_sq)

    if emit_mask:
        out_ref[...] = mask.astype(out_ref.dtype)
    else:
        # torch: dist == 0 -> eps, and weights = dist^2 -> eps^2 in squared space
        eps_sq = jnp.float32(1e-7) * jnp.float32(1e-7)
        sq = jnp.where(sq == jnp.float32(0.0), eps_sq, sq)
        out_ref[...] = jnp.where(mask, sq, jnp.float32(0.0))


def _choose_tile_m(m, n_pad, d, out_bytes):
    budget = int(_vmem_capacity_bytes() * 0.4)  # headroom for temps / compiler scratch
    # double-buffered output + ~3 live f32 [tm, n] temporaries + query tile
    per_row = n_pad * (2 * out_bytes + 3 * 4) + 2 * d * 4
    tile_m = budget // max(per_row, 1)
    # keep >= ~4 grid steps where possible so v7x's two TensorCores both get work
    tile_m = min(tile_m, max(_ROW_TILE, _round_up(pl.cdiv(m, 4), _ROW_TILE)))
    tile_m = max(_ROW_TILE, min(2048, (tile_m // _ROW_TILE) * _ROW_TILE))
    return int(tile_m)


def _pallas_radius_search(queries, data, radius, *, emit_mask):
    """Dense [m_pad, n_pad] output: int8 in-radius mask (emit_mask=True) or f32
    masked squared distances (eps^2 for exact matches, 0 outside the radius)."""
    queries = jnp.asarray(queries, jnp.float32)
    data = jnp.asarray(data, jnp.float32)
    m, d = queries.shape
    n, d2 = data.shape
    assert d == d2, "queries and data must share the coordinate dimension"

    out_dtype = jnp.int8 if emit_mask else jnp.float32
    out_bytes = 1 if emit_mask else 4

    # lane-dense output: pad the data axis to a multiple of 128 (unmasked stores)
    n_pad = _round_up(n, _LANE)
    tile_m = _choose_tile_m(m, n_pad, d, out_bytes)
    m_pad = _round_up(m, tile_m)

    # far-away sentinel: padded rows / columns never land inside any real radius
    sentinel = jnp.float32(1e15)
    data_t = jnp.full((d, n_pad), sentinel, jnp.float32).at[:, :n].set(data.T)
    q_pad = jnp.full((m_pad, d), sentinel, jnp.float32).at[:m, :].set(queries)

    vmem_estimate = (2 * tile_m * n_pad * out_bytes   # double-buffered output
                     + 4 * tile_m * n_pad * 4         # live f32 temporaries
                     + 2 * d * n_pad * 4              # data tile (double-buffered)
                     + 2 * tile_m * d * 4)            # query tile
    vmem_limit = int(min(_vmem_capacity_bytes() - (4 << 20),
                         max(32 << 20, vmem_estimate + (8 << 20))))

    kernel = functools.partial(
        _radius_kernel, radius_sq=float(radius) ** 2, dim=d,
        emit_mask=emit_mask, use_mxu=(d >= _MXU_MIN_DIM))

    return pl.pallas_call(
        kernel,
        out_shape=jax.ShapeDtypeStruct((m_pad, n_pad), out_dtype),
        grid_spec=pltpu.PrefetchScalarGridSpec(
            num_scalar_prefetch=0,
            grid=(m_pad // tile_m,),
            in_specs=[pl.BlockSpec((tile_m, d), lambda i: (i, 0)),
                      pl.BlockSpec((d, n_pad), lambda i: (0, 0))],
            out_specs=pl.BlockSpec((tile_m, n_pad), lambda i: (i, 0)),
        ),
        compiler_params=pltpu.CompilerParams(
            dimension_semantics=("parallel",),
            vmem_limit_bytes=vmem_limit,
        ),
    )(q_pad, data_t)


class NeighborSearch:
    """JAX/Pallas port of neuralop NeighborSearch (native PyTorch path)."""

    def __init__(self, use_open3d=True, return_norm=False):
        # open3d path is not available; always use the native (Pallas) search.
        self.use_open3d = False
        self.return_norm = return_norm

    def __call__(self, data, queries, radius):
        m, n = queries.shape[0], data.shape[0]
        dense = _pallas_radius_search(queries, data, radius,
                                      emit_mask=not self.return_norm)
        dense = np.asarray(jax.block_until_ready(dense))[:m, :n]

        # TODO(synk): torch.nonzero has a data-dependent output shape with no
        # static-shape Pallas/JAX equivalent; CRS extraction stays host-side and
        # the int64 index arrays are NumPy (no global jax_enable_x64 flag).
        rows, cols = np.nonzero(dense)          # row-major == torch.nonzero order

        nbr_dict = {}
        if self.return_norm:
            # dense holds masked *squared* distances, i.e. torch's dist**2 weights
            nbr_dict["weights"] = jnp.asarray(dense[rows, cols], jnp.float32)

        counts = np.bincount(rows, minlength=m).astype(np.int64)
        splits = np.concatenate([np.zeros((1,), np.int64), np.cumsum(counts)])
        nbr_dict["neighbors_index"] = cols.astype(np.int64)
        nbr_dict["neighbors_row_splits"] = splits.astype(np.int64)
        return nbr_dict


if __name__ == "__main__":
    key = jax.random.PRNGKey(0)
    k_data, k_q = jax.random.split(key)

    n_data, m_queries, dim = 200, 100, 3      # deliberately not 8/128-aligned
    radius = 0.25

    data = jax.random.uniform(k_data, (n_data, dim), dtype=jnp.float32)
    queries = jax.random.uniform(k_q, (m_queries, dim), dtype=jnp.float32)

    out = NeighborSearch(use_open3d=False, return_norm=True)(data, queries, radius)
    out_mask = NeighborSearch(use_open3d=False, return_norm=False)(data, queries, radius)

    idx = out["neighbors_index"]
    splits = out["neighbors_row_splits"]
    weights = np.asarray(jax.block_until_ready(out["weights"]))

    # --- structural checks ----------------------------------------------------
    assert idx.dtype == np.int64 and splits.dtype == np.int64
    assert splits.shape == (m_queries + 1,)
    assert int(splits[0]) == 0 and int(splits[-1]) == idx.shape[0] == weights.shape[0]
    # both kernel variants (f32 sq-dist output vs int8 mask output) agree
    assert np.array_equal(idx, out_mask["neighbors_index"])
    assert np.array_equal(splits, out_mask["neighbors_row_splits"])

    # --- reconstruct the kernel's dense neighbor mask from CRS -----------------
    K = np.zeros((m_queries, n_data), dtype=bool)
    for i in range(m_queries):
        cols_i = idx[splits[i]:splits[i + 1]]
        assert np.all(np.diff(cols_i) > 0)     # row-major nonzero ordering per row
        K[i, cols_i] = True
    assert np.array_equal(K.sum(axis=1), np.diff(splits))

    # --- float64 reference (exact math), tolerance band at the radius boundary -
    dn = np.asarray(data, np.float64)
    qn = np.asarray(queries, np.float64)
    ref_dist = np.sqrt(((qn[:, None, :] - dn[None, :, :]) ** 2).sum(-1))
    tol = 1e-5
    definitely_in = ref_dist < radius - tol
    definitely_out = ref_dist > radius + tol
    assert K[definitely_in].all()
    assert not K[definitely_out].any()

    # weights are the squared distances of the kernel-selected neighbors
    rows_k, cols_k = np.nonzero(K)
    ref_d = np.where(ref_dist[rows_k, cols_k] == 0.0, 1e-7, ref_dist[rows_k, cols_k])
    assert np.allclose(weights, ref_d ** 2, rtol=1e-4, atol=1e-12)

    print("KERNEL_OK")
</pallas_src>

<mosaic_0001>
module attributes {stable_mosaic.version = 11 : i64} {
  func.func @_radius_kernel(%arg0: i32, %arg1: memref<32x3xf32, #tpu.memory_space<vmem>>, %arg2: memref<3x256xf32, #tpu.memory_space<vmem>>, %arg3: memref<32x256xf32, #tpu.memory_space<vmem>>) attributes {dimension_semantics = [#tpu.dimension_semantics<parallel>], iteration_bounds = array<i64: 4>, scalar_prefetch = 0 : i64, scratch_operands = 0 : i64, tpu.core_type = #tpu.core_type<tc>, window_params = [{transform_indices = @transform_0, window_bounds = array<i64: 32, 3>}, {pipeline_mode = #tpu.pipeline_mode<synchronous>, transform_indices = @transform_1, window_bounds = array<i64: 3, 256>}, {transform_indices = @transform_2, window_bounds = array<i64: 32, 256>}]} {
    %c0 = arith.constant 0 : index
    %c0_0 = arith.constant 0 : index
    %0 = vector.load %arg1[%c0, %c0_0] : memref<32x3xf32, #tpu.memory_space<vmem>>, vector<32x3xf32>
    %c0_1 = arith.constant 0 : index
    %c0_2 = arith.constant 0 : index
    %1 = vector.load %arg2[%c0_1, %c0_2] : memref<3x256xf32, #tpu.memory_space<vmem>>, vector<3x256xf32>
    %cst = arith.constant 0.000000e+00 : f32
    %2 = vector.broadcast %cst : f32 to vector<32x256xf32>
    %3 = vector.extract_strided_slice %0 {offsets = [0, 0], sizes = [32, 1], strides = [1, 1]} : vector<32x3xf32> to vector<32x1xf32>
    %4 = vector.extract_strided_slice %1 {offsets = [0, 0], sizes = [1, 256], strides = [1, 1]} : vector<3x256xf32> to vector<1x256xf32>
    %5 = vector.broadcast %3 : vector<32x1xf32> to vector<32x256xf32>
    %6 = vector.broadcast %4 : vector<1x256xf32> to vector<32x256xf32>
    %7 = arith.subf %5, %6 : vector<32x256xf32>
    %8 = arith.mulf %7, %7 : vector<32x256xf32>
    %9 = arith.addf %2, %8 : vector<32x256xf32>
    %10 = vector.extract_strided_slice %0 {offsets = [0, 1], sizes = [32, 1], strides = [1, 1]} : vector<32x3xf32> to vector<32x1xf32>
    %11 = vector.extract_strided_slice %1 {offsets = [1, 0], sizes = [1, 256], strides = [1, 1]} : vector<3x256xf32> to vector<1x256xf32>
    %12 = vector.broadcast %10 : vector<32x1xf32> to vector<32x256xf32>
    %13 = vector.broadcast %11 : vector<1x256xf32> to vector<32x256xf32>
    %14 = arith.subf %12, %13 : vector<32x256xf32>
    %15 = arith.mulf %14, %14 : vector<32x256xf32>
    %16 = arith.addf %9, %15 : vector<32x256xf32>
    %17 = vector.extract_strided_slice %0 {offsets = [0, 2], sizes = [32, 1], strides = [1, 1]} : vector<32x3xf32> to vector<32x1xf32>
    %18 = vector.extract_strided_slice %1 {offsets = [2, 0], sizes = [1, 256], strides = [1, 1]} : vector<3x256xf32> to vector<1x256xf32>
    %19 = vector.broadcast %17 : vector<32x1xf32> to vector<32x256xf32>
    %20 = vector.broadcast %18 : vector<1x256xf32> to vector<32x256xf32>
    %21 = arith.subf %19, %20 : vector<32x256xf32>
    %22 = arith.mulf %21, %21 : vector<32x256xf32>
    %23 = arith.addf %16, %22 : vector<32x256xf32>
    %cst_3 = arith.constant 6.250000e-02 : f32
    %24 = vector.broadcast %cst_3 : f32 to vector<32x256xf32>
    %25 = arith.cmpf ole, %23, %24 : vector<32x256xf32>
    %cst_4 = arith.constant 1.000000e-07 : f32
    %cst_5 = arith.constant 1.000000e-07 : f32
    %26 = arith.mulf %cst_4, %cst_5 : f32
    %cst_6 = arith.constant 0.000000e+00 : f32
    %27 = vector.broadcast %cst_6 : f32 to vector<32x256xf32>
    %28 = arith.cmpf oeq, %23, %27 : vector<32x256xf32>
    %29 = vector.broadcast %26 : f32 to vector<32x256xf32>
    %30 = arith.select %28, %29, %23 : vector<32x256xi1>, vector<32x256xf32>
    %cst_7 = arith.constant 0.000000e+00 : f32
    %31 = vector.broadcast %cst_7 : f32 to vector<32x256xf32>
    %32 = arith.select %25, %30, %31 : vector<32x256xi1>, vector<32x256xf32>
    %c0_8 = arith.constant 0 : index
    %c0_9 = arith.constant 0 : index
    %33 = vector.load %arg3[%c0_8, %c0_9] : memref<32x256xf32, #tpu.memory_space<vmem>>, vector<32x256xf32>
    tpu.vector_store %arg3[%c0_8, %c0_9], %32 {strides = array<i32>} : memref<32x256xf32, #tpu.memory_space<vmem>>, vector<32x256xf32>,
    return
  }
  func.func @transform_0(%arg0: i32) -> (i32, i32) {
    %c0_i32 = arith.constant 0 : i32
    %c0_i32_0 = arith.constant 0 : i32
    return %arg0, %c0_i32 : i32, i32
  }
  func.func @transform_1(%arg0: i32) -> (i32, i32) {
    %c0_i32 = arith.constant 0 : i32
    %c0_i32_0 = arith.constant 0 : i32
    %c0_i32_1 = arith.constant 0 : i32
    return %c0_i32, %c0_i32_0 : i32, i32
  }
  func.func @transform_2(%arg0: i32) -> (i32, i32) {
    %c0_i32 = arith.constant 0 : i32
    %c0_i32_0 = arith.constant 0 : i32
    return %arg0, %c0_i32 : i32, i32
  }
}

</mosaic_0001>

<llo_original>
// kernel: tpu_custom_call.1
$region0: #{tpu_custom_call.1}
  #allocation0 [shape = 'u32[]', space=smem, size = 0x4, offset = 0x4, fixed_abs, tag = 'smem constant byte address 0x4 - core index']
  #allocation1 [shape = 'u32[144,128]{1,0:T(1,128)}', space=vmem, size = 0x12000, scoped, tag = 'internal scratch']
  %s0 = inlined_call_operand.vmem [shape: f32[128,3], index: 0, kind: input, shape index: {}]
  %s1 = inlined_call_operand.vmem [shape: f32[3,256], index: 1, kind: input, shape index: {}]
  %s2 = inlined_call_operand.hbm [shape: f32[128,256], index: 2, kind: output, shape index: {}]
  %s3 = sld [smem:[#allocation0]]
  $region41: #{tpu_custom_call.1} parent=0
    _
  %s5 = ssub.s32 1, %s3
  %s6 = scalar_select 0, %s5, %s3
  $region1: #{tpu_custom_call.1} parent=0
    #allocation2 [shape = 'u8[65536]{0}', space=vmem, size = 0x10000, scoped, tag = 'output window, operand 0']
    #allocation3 [shape = 's32[2]{0}', space=sflag, size = 0x8, scoped, tag = 'scoped memory for tpu_custom_call.1']
    %7 = vsyncpa [#allocation3], 0
    %s8 = scalar_lea.sflag [#allocation3], 1
    %9 = vsyncpa %s8, 0
    loop: start=0, step=1, limit=6
    $region2: #{tpu_custom_call.1} parent=1 // loop_pre_header
      _
    $region3: #{tpu_custom_call.1} parent=1 // loop_header
      %s11 = sphi 0, %s15
      %p12 = scmp.ge.s32.totalorder %s11, 6
      %s21 = sphi 0, %s23
      %s24 = sphi 0, %s21
      %s25 = sphi 0, %s24
      %s41 = sphi 0, %s25
      %s45 = sphi 0, %s45
      %s47 = sphi 0, %s45
      %s48 = sphi 0, %s47
      %s62 = sphi 0, %s48
      %s68 = sphi 0, %s70
      %s71 = sphi 0, %s68
      %s72 = sphi 0, %s71
      %s88 = sphi 0, %s72
    $region4: #{tpu_custom_call.1} parent=1 // loop_header_branch
      %14 = sbr.rel (%p12) target = $region8
    $region5: #{tpu_custom_call.1} parent=1 // loop_body
      %s16 = ssub.s32 %s11, 1
      %s17 = ssub.s32 %s11, 2
      %s18 = sadd.s32 %s11, 1
      %s19 = ssub.s32 %s11, %s18
      %p20 = scmp.eq.s32.totalorder %s19, 0
      %s22 = sadd.s32 %s21, 1
      %s23 = scalar_select %p20, %s21, %s22
      %p26 = pneg %p20
      %p27 = scmp.eq.s32.totalorder %s11, 3
      %p28 = por %p26, %p27
      %p29 = scmp.ne.s32.totalorder %s21, %s24
      %p30 = scmp.eq.s32.totalorder %s11, 0
      %p31 = por %p29, %p30
      %p32 = scmp.ne.s32.totalorder %s21, %s24
      %p33 = scmp.eq.s32.totalorder %s16, 3
      %p34 = por %p32, %p33
      %p35 = scmp.ne.s32.totalorder %s24, %s25
      %p36 = scmp.eq.s32.totalorder %s16, 0
      %p37 = por %p35, %p36
      %p38 = scmp.ne.s32.totalorder %s24, %s25
      %p39 = scmp.eq.s32.totalorder %s17, 3
      %p40 = por %p38, %p39
      %p42 = scmp.ne.s32.totalorder %s25, %s41
      %p43 = scmp.eq.s32.totalorder %s17, 0
      %p44 = por %p42, %p43
      %s46 = sadd.s32 %s45, 1
      %p49 = scmp.eq.s32.totalorder %s11, 3
      %p50 = scmp.ne.s32.totalorder %s45, %s47
      %p51 = scmp.eq.s32.totalorder %s11, 0
      %p52 = por %p50, %p51
      %p53 = scmp.ne.s32.totalorder %s45, %s47
      %p54 = scmp.eq.s32.totalorder %s16, 3
      %p55 = por %p53, %p54
      %p56 = scmp.ne.s32.totalorder %s47, %s48
      %p57 = scmp.eq.s32.totalorder %s16, 0
      %p58 = por %p56, %p57
      %p59 = scmp.ne.s32.totalorder %s47, %s48
      %p60 = scmp.eq.s32.totalorder %s17, 3
      %p61 = por %p59, %p60
      %p63 = scmp.ne.s32.totalorder %s48, %s62
      %p64 = scmp.eq.s32.totalorder %s17, 0
      %p65 = por %p63, %p64
      %s66 = ssub.s32 %s11, %s18
      %p67 = scmp.eq.s32.totalorder %s66, 0
      %s69 = sadd.s32 %s68, 1
      %s70 = scalar_select %p67, %s68, %s69
      %p73 = pneg %p67
      %p74 = scmp.eq.s32.totalorder %s11, 3
      %p75 = por %p73, %p74
      %p76 = scmp.ne.s32.totalorder %s68, %s71
      %p77 = scmp.eq.s32.totalorder %s11, 0
      %p78 = por %p76, %p77
      %p79 = scmp.ne.s32.totalorder %s68, %s71
      %p80 = scmp.eq.s32.totalorder %s16, 3
      %p81 = por %p79, %p80
      %p82 = scmp.ne.s32.totalorder %s71, %s72
      %p83 = scmp.eq.s32.totalorder %s16, 0
      %p84 = por %p82, %p83
      %p85 = scmp.ne.s32.totalorder %s71, %s72
      %p86 = scmp.eq.s32.totalorder %s17, 3
      %p87 = por %p85, %p86
      %p89 = scmp.ne.s32.totalorder %s72, %s88
      %p90 = scmp.eq.s32.totalorder %s17, 0
      %p91 = por %p89, %p90
      %p92 = scmp.le.s32.totalorder 1, %s11
      %p93 = scmp.lt.s32.totalorder %s11, 5
      %p94 = pnand %p92, %p93
      %p95 = pneg %p94
      // Predicated region
      $region9: #{tpu_custom_call.1} parent=5 // pred_check
        _
      $region10: #{tpu_custom_call.1} parent=5 // pred_check_branch
        %97 = sbr.rel (%p94) target = $region12
      $region11: #{tpu_custom_call.1} parent=5 // pred_region
        %s98 = ssub.s32 %s11, 1
        // Predicated region
        $region13: #{tpu_custom_call.1} parent=11 // pred_check
          %p99 = pneg %p58
        $region14: #{tpu_custom_call.1} parent=11 // pred_check_branch
          %101 = sbr.rel (%p99) target = $region16
        $region15: #{tpu_custom_call.1} parent=11 // pred_region
          _
        $region16: #{tpu_custom_call.1} parent=11 // pred_fallthru
          _
      $region12: #{tpu_custom_call.1} parent=5 // pred_fallthru
        _
      %p102 = scmp.lt.s32.totalorder %s11, 4
      // Predicated region
      $region17: #{tpu_custom_call.1} parent=5 // pred_check
        %p103 = pneg %p102
      $region18: #{tpu_custom_call.1} parent=5 // pred_check_branch
        %105 = sbr.rel (%p103) target = $region20
      $region19: #{tpu_custom_call.1} parent=5 // pred_region
        // Predicated region
        $region21: #{tpu_custom_call.1} parent=19 // pred_check
          %p106 = pneg %p31
        $region22: #{tpu_custom_call.1} parent=19 // pred_check_branch
          %108 = sbr.rel (%p106) target = $region24
        $region23: #{tpu_custom_call.1} parent=19 // pred_region
          %s109 = smul.u32 4, %s11
          %p110 = scmp.lt.s32.totalorder %s109, 15
          %s111 = scalar_select %p110, %s109, 15
          %s112 = smul.addr %s111, 8
          %s113 = scalar_lea.vmem %s0, %s112
          %s114 = smul.u32 4, %s11
        $region24: #{tpu_custom_call.1} parent=19 // pred_fallthru
          _
      $region20: #{tpu_custom_call.1} parent=5 // pred_fallthru
        _
      %p115 = scmp.le.s32.totalorder 1, %s11
      %p116 = scmp.lt.s32.totalorder %s11, 5
      %p117 = pnand %p115, %p116
      %p118 = pneg %p117
      // Predicated region
      $region25: #{tpu_custom_call.1} parent=5 // pred_check
        _
      $region26: #{tpu_custom_call.1} parent=5 // pred_check_branch
        %120 = sbr.rel (%p117) target = $region28
      $region27: #{tpu_custom_call.1} parent=5 // pred_region
        %s121 = ssub.s32 %s11, 1
        %s122 = smul.u32 4, %s16
        %p123 = scmp.lt.s32.totalorder %s122, 15
        %s124 = scalar_select %p123, %s122, 15
        %s125 = smul.addr %s124, 8
        %s126 = scalar_lea.vmem %s0, %s125
        %p127 = pneg %p37
        %p128 = pneg %p34
        %p129 = pneg %p58
        %p130 = pneg %p55
        %p131 = pneg %p84
        %p132 = pneg %p81
        %s133 = sand.u32 %s71, 1
        %s134 = scalar_lea.sflag [#allocation3], %s133
        %s135 = sand.u32 %s71, 1
        %s136 = smul.addr %s135, 64
        %s137 = scalar_lea.vmem [#allocation2], %s136
        %s138 = smul.u32 4, %s16
        %p139 = scmp.lt.s32.totalorder %s138, 15
        %s140 = scalar_select %p139, %s138, 15
        %s141 = smul.addr %s140, 8
        %s142 = scalar_lea.vmem %s0, %s141
        %s143 = smul.u32 4, %s16
        %s144 = smul.u32 4, %s16
        %v145 = vld [vmem:[%s142] sm:$0xff]
        %v146 = vld [vmem:[%s142 + $0x8] sm:$0xff]
        %v147 = vld [vmem:[%s142 + $0x10] sm:$0xff]
        %v148 = vld [vmem:[%s142 + $0x18] sm:$0xff]
        %v149 = vld [vmem:[%s1] sm:$0x77]
        %151 = vset.pattern.permute.xlu0 0
        %152 = vperm.xlu0 %151, %v145
        %v153 = vpop.permute.xlu0 %152
        %156 = vset.pattern.permute.xlu0 0
        %157 = vperm.xlu0 %156, %v146
        %v158 = vpop.permute.xlu0 %157
        %161 = vset.pattern.permute.xlu0 0
        %162 = vperm.xlu0 %161, %v147
        %v163 = vpop.permute.xlu0 %162
        %166 = vset.pattern.permute.xlu0 0
        %167 = vperm.xlu0 %166, %v148
        %v168 = vpop.permute.xlu0 %167
        %v171 = vlaneseq
        %v172 = vshrl.u32 %v171, 7
        %v173 = vsub.s32 0, %v172
        %v174 = vrot.slane %v149, %v173
        %v175 = vlaneseq
        %v176 = vshrl.u32 %v175, 7
        %v177 = vsub.s32 4, %v176
        %v178 = vrot.slane %v149, %v177
        %v181 = vlaneseq
        %v182 = vshrl.u32 %v181, 7
        %v183 = vsub.s32 0, %v182
        %v184 = vrot.slane %v174, %v183
        %v185 = vlaneseq
        %v186 = vshrl.u32 %v185, 7
        %v187 = vsub.s32 0, %v186
        %v188 = vrot.slane %v178, %v187
        %v189 = vsub.f32 %v153, %v184
        %v190 = vsub.f32 %v153, %v188
        %v191 = vsub.f32 %v158, %v184
        %v192 = vsub.f32 %v158, %v188
        %v193 = vsub.f32 %v163, %v184
        %v194 = vsub.f32 %v163, %v188
        %v195 = vsub.f32 %v168, %v184
        %v196 = vsub.f32 %v168, %v188
        %v197 = vmul.f32 %v189, %v189
        %v198 = vmul.f32 %v190, %v190
        %v199 = vmul.f32 %v191, %v191
        %v200 = vmul.f32 %v192, %v192
        %v201 = vmul.f32 %v193, %v193
        %v202 = vmul.f32 %v194, %v194
        %v203 = vmul.f32 %v195, %v195
        %v204 = vmul.f32 %v196, %v196
        %v205 = vadd.f32 %v197, 0.0
        %v206 = vadd.f32 %v198, 0.0
        %v207 = vadd.f32 %v199, 0.0
        %v208 = vadd.f32 %v200, 0.0
        %v209 = vadd.f32 %v201, 0.0
        %v210 = vadd.f32 %v202, 0.0
        %v211 = vadd.f32 %v203, 0.0
        %v212 = vadd.f32 %v204, 0.0
        %213 = vset.pattern.permute.xlu0 1
        %214 = vperm.xlu0 %213, %v145
        %v215 = vpop.permute.xlu0 %214
        %217 = vset.pattern.permute.xlu0 1
        %218 = vperm.xlu0 %217, %v146
        %v219 = vpop.permute.xlu0 %218
        %221 = vset.pattern.permute.xlu0 1
        %222 = vperm.xlu0 %221, %v147
        %v223 = vpop.permute.xlu0 %222
        %225 = vset.pattern.permute.xlu0 1
        %226 = vperm.xlu0 %225, %v148
        %v227 = vpop.permute.xlu0 %226
        %v229 = vlaneseq
        %v230 = vshrl.u32 %v229, 7
        %v231 = vsub.s32 1, %v230
        %v232 = vrot.slane %v149, %v231
        %v233 = vlaneseq
        %v234 = vshrl.u32 %v233, 7
        %v235 = vsub.s32 5, %v234
        %v236 = vrot.slane %v149, %v235
        %v239 = vlaneseq
        %v240 = vshrl.u32 %v239, 7
        %v241 = vsub.s32 1, %v240
        %v242 = vrot.slane %v232, %v241
        %v243 = vlaneseq
        %v244 = vshrl.u32 %v243, 7
        %v245 = vsub.s32 1, %v244
        %v246 = vrot.slane %v236, %v245
        %v247 = vsub.f32 %v215, %v242
        %v248 = vsub.f32 %v215, %v246
        %v249 = vsub.f32 %v219, %v242
        %v250 = vsub.f32 %v219, %v246
        %v251 = vsub.f32 %v223, %v242
        %v252 = vsub.f32 %v223, %v246
        %v253 = vsub.f32 %v227, %v242
        %v254 = vsub.f32 %v227, %v246
        %v255 = vmul.f32 %v247, %v247
        %v256 = vmul.f32 %v248, %v248
        %v257 = vmul.f32 %v249, %v249
        %v258 = vmul.f32 %v250, %v250
        %v259 = vmul.f32 %v251, %v251
        %v260 = vmul.f32 %v252, %v252
        %v261 = vmul.f32 %v253, %v253
        %v262 = vmul.f32 %v254, %v254
        %v263 = vadd.f32 %v205, %v255
        %v264 = vadd.f32 %v206, %v256
        %v265 = vadd.f32 %v207, %v257
        %v266 = vadd.f32 %v208, %v258
        %v267 = vadd.f32 %v209, %v259
        %v268 = vadd.f32 %v210, %v260
        %v269 = vadd.f32 %v211, %v261
        %v270 = vadd.f32 %v212, %v262
        %271 = vset.pattern.permute.xlu0 2
        %272 = vperm.xlu0 %271, %v145
        %v273 = vpop.permute.xlu0 %272
        %275 = vset.pattern.permute.xlu0 2
        %276 = vperm.xlu0 %275, %v146
        %v277 = vpop.permute.xlu0 %276
        %279 = vset.pattern.permute.xlu0 2
        %280 = vperm.xlu0 %279, %v147
        %v281 = vpop.permute.xlu0 %280
        %283 = vset.pattern.permute.xlu0 2
        %284 = vperm.xlu0 %283, %v148
        %v285 = vpop.permute.xlu0 %284
        %v287 = vlaneseq
        %v288 = vshrl.u32 %v287, 7
        %v289 = vsub.s32 2, %v288
        %v290 = vrot.slane %v149, %v289
        %v291 = vlaneseq
        %v292 = vshrl.u32 %v291, 7
        %v293 = vsub.s32 6, %v292
        %v294 = vrot.slane %v149, %v293
        %v297 = vlaneseq
        %v298 = vshrl.u32 %v297, 7
        %v299 = vsub.s32 2, %v298
        %v300 = vrot.slane %v290, %v299
        %v301 = vlaneseq
        %v302 = vshrl.u32 %v301, 7
        %v303 = vsub.s32 2, %v302
        %v304 = vrot.slane %v294, %v303
        %v305 = vsub.f32 %v273, %v300
        %v306 = vsub.f32 %v273, %v304
        %v307 = vsub.f32 %v277, %v300
        %v308 = vsub.f32 %v277, %v304
        %v309 = vsub.f32 %v281, %v300
        %v310 = vsub.f32 %v281, %v304
        %v311 = vsub.f32 %v285, %v300
        %v312 = vsub.f32 %v285, %v304
        %v313 = vmul.f32 %v305, %v305
        %v314 = vmul.f32 %v306, %v306
        %v315 = vmul.f32 %v307, %v307
        %v316 = vmul.f32 %v308, %v308
        %v317 = vmul.f32 %v309, %v309
        %v318 = vmul.f32 %v310, %v310
        %v319 = vmul.f32 %v311, %v311
        %v320 = vmul.f32 %v312, %v312
        %v321 = vadd.f32 %v263, %v313
        %v322 = vadd.f32 %v264, %v314
        %v323 = vadd.f32 %v265, %v315
        %v324 = vadd.f32 %v266, %v316
        %v325 = vadd.f32 %v267, %v317
        %v326 = vadd.f32 %v268, %v318
        %v327 = vadd.f32 %v269, %v319
        %v328 = vadd.f32 %v270, %v320
        %vm329 = vcmp.le.f32.partialorder %v321, 0.0625
        %vm330 = vcmp.le.f32.partialorder %v322, 0.0625
        %vm331 = vcmp.le.f32.partialorder %v323, 0.0625
        %vm332 = vcmp.le.f32.partialorder %v324, 0.0625
        %vm333 = vcmp.le.f32.partialorder %v325, 0.0625
        %vm334 = vcmp.le.f32.partialorder %v326, 0.0625
        %vm335 = vcmp.le.f32.partialorder %v327, 0.0625
        %vm336 = vcmp.le.f32.partialorder %v328, 0.0625
        %vm337 = vcmp.eq.f32.partialorder %v321, 0.0
        %vm338 = vcmp.eq.f32.partialorder %v322, 0.0
        %vm339 = vcmp.eq.f32.partialorder %v323, 0.0
        %vm340 = vcmp.eq.f32.partialorder %v324, 0.0
        %vm341 = vcmp.eq.f32.partialorder %v325, 0.0
        %vm342 = vcmp.eq.f32.partialorder %v326, 0.0
        %vm343 = vcmp.eq.f32.partialorder %v327, 0.0
        %vm344 = vcmp.eq.f32.partialorder %v328, 0.0
        %v345 = vsel %vm337, 1e-14, %v321
        %v346 = vsel %vm338, 1e-14, %v322
        %v347 = vsel %vm339, 1e-14, %v323
        %v348 = vsel %vm340, 1e-14, %v324
        %v349 = vsel %vm341, 1e-14, %v325
        %v350 = vsel %vm342, 1e-14, %v326
        %v351 = vsel %vm343, 1e-14, %v327
        %v352 = vsel %vm344, 1e-14, %v328
        %v353 = vsel %vm329, %v345, 0.0
        %v354 = vsel %vm330, %v346, 0.0
        %v355 = vsel %vm331, %v347, 0.0
        %v356 = vsel %vm332, %v348, 0.0
        %v357 = vsel %vm333, %v349, 0.0
        %v358 = vsel %vm334, %v350, 0.0
        %v359 = vsel %vm335, %v351, 0.0
        %v360 = vsel %vm336, %v352, 0.0
        %361 = vst [vmem:[%s137] sm:$0xff] %v353
        %362 = vst [vmem:[%s137 + $0x8] sm:$0xff] %v354
        %363 = vst [vmem:[%s137 + $0x10] sm:$0xff] %v355
        %364 = vst [vmem:[%s137 + $0x18] sm:$0xff] %v356
        %365 = vst [vmem:[%s137 + $0x20] sm:$0xff] %v357
        %366 = vst [vmem:[%s137 + $0x28] sm:$0xff] %v358
        %367 = vst [vmem:[%s137 + $0x30] sm:$0xff] %v359
        %368 = vst [vmem:[%s137 + $0x38] sm:$0xff] %v360
        %s369 = sand.u32 %s71, 1
        %s370 = scalar_lea.sflag [#allocation3], %s369
        %s371 = sand.u32 %s71, 1
        %s372 = smul.addr %s371, 64
        %s373 = scalar_lea.vmem [#allocation2], %s372
        // Predicated region
        $region29: #{tpu_custom_call.1} parent=27 // pred_check
          %p374 = pneg %p81
        $region30: #{tpu_custom_call.1} parent=27 // pred_check_branch
          %376 = sbr.rel (%p374) target = $region32
        $region31: #{tpu_custom_call.1} parent=27 // pred_region
          %s377 = smul.u32 4, %s16
          %s379 = ssub.s32 1024, 1024
          %380 = vsyncadd %s370, %s379
          %s381 = smul.addr %s377, 2
          %s382 = smul.addr %s381, 128
          %s383 = scalar_lea.hbm %s2, %s382
          %s384 = sshll.u32 %s373, 4
          %s385 = int_to_ptr.vmem [resolvable:$true] %s384
          %390 = dma.vmem_to_hbm [thread:$0]  %s385, 1024, %s383, %s370, 256, 256, 16
        $region32: #{tpu_custom_call.1} parent=27 // pred_fallthru
          _
      $region28: #{tpu_custom_call.1} parent=5 // pred_fallthru
        _
      %p391 = scmp.le.s32.totalorder 2, %s11
      // Predicated region
      $region33: #{tpu_custom_call.1} parent=5 // pred_check
        %p392 = pneg %p391
      $region34: #{tpu_custom_call.1} parent=5 // pred_check_branch
        %394 = sbr.rel (%p392) target = $region36
      $region35: #{tpu_custom_call.1} parent=5 // pred_region
        %s395 = ssub.s32 %s11, 2
        // Predicated region
        $region37: #{tpu_custom_call.1} parent=35 // pred_check
          %p396 = pneg %p87
        $region38: #{tpu_custom_call.1} parent=35 // pred_check_branch
          %398 = sbr.rel (%p396) target = $region40
        $region39: #{tpu_custom_call.1} parent=35 // pred_region
          %s399 = sand.u32 %s72, 1
          %s400 = scalar_lea.sflag [#allocation3], %s399
          %s401 = sand.u32 %s72, 1
          %s402 = smul.addr %s401, 64
          %s403 = scalar_lea.vmem [#allocation2], %s402
          %404 = dma.done %s400, 1024
        $region40: #{tpu_custom_call.1} parent=35 // pred_fallthru
          _
      $region36: #{tpu_custom_call.1} parent=5 // pred_fallthru
        _
    $region6: #{tpu_custom_call.1} parent=1 // loop_footer
      %s15 = sadd.s32 1, %s11
    $region7: #{tpu_custom_call.1} parent=1 // loop_footer_branch
      %10 = sbr.rel target = $region3
    $region8: #{tpu_custom_call.1} parent=1 // loop_exit
      _
    %405 = vsyncpa [#allocation3], 1
    %s406 = scalar_lea.sflag [#allocation3], 1
    %407 = vsyncpa %s406, 1

</llo_original>
